<compile_context>
chip_gen: v7x
topology: tpu7x:2x2x1
jax: 0.10.0
libtpu: 0.0.40
codegen_flags: <defaults>
</compile_context>

<pallas_src>
import math

import jax
import jax.numpy as jnp
from jax.experimental import pallas as pl
from jax.experimental.pallas import tpu as pltpu


# --------------------------------------------------------------------------- #
# Sinusoidal table (built once per model; pre-cast to the compute dtype).
# --------------------------------------------------------------------------- #
def make_pe_table(d_model: int, max_len: int = 5000,
                  dtype=jnp.float32) -> jnp.ndarray:
    """Deterministic sinusoidal positional-encoding table [max_len, d_model]."""
    position = jnp.arange(max_len, dtype=jnp.float32)[:, None]            # [L, 1]
    div_term = jnp.exp(
        jnp.arange(0, d_model, 2, dtype=jnp.float32)
        * (-(math.log(10000.0) / d_model))
    )                                                                      # [ceil(D/2)]
    angles = position * div_term                                           # [L, ceil(D/2)]
    pe = jnp.zeros((max_len, d_model), dtype=jnp.float32)
    pe = pe.at[:, 0::2].set(jnp.sin(angles))
    # cos half has floor(D/2) columns -- slice so odd d_model works.
    pe = pe.at[:, 1::2].set(jnp.cos(angles)[:, : d_model // 2])
    return pe.astype(dtype)


# --------------------------------------------------------------------------- #
# Kernel
# --------------------------------------------------------------------------- #
def _add_pe_kernel(x_ref, pe_ref, o_ref):
    # x_ref: (TB, TS, L); pe_ref: (1, TS, L) -- broadcast over batch and add.
    o_ref[...] = x_ref[...] + pe_ref[...]


# --------------------------------------------------------------------------- #
# Layout / tiling helpers
# --------------------------------------------------------------------------- #
def _round_up(x: int, m: int) -> int:
    return (x + m - 1) // m * m


def _sublane_min(elem_bytes: int) -> int:
    # Native sublane tile height: 8 for f32, 16 for bf16, 32 for int8/fp8.
    return max(8, 32 // elem_bytes)


def _fold_factor(seq_len: int, d_model: int) -> int:
    """Smallest r with (r*d_model) % 128 == 0 and r | seq_len, else 1."""
    r = 128 // math.gcd(d_model, 128)
    return r if (seq_len % r == 0) else 1


def _choose_tiles(batch: int, rows: int, lane: int, elem_bytes: int,
                  target_bytes: int) -> tuple[int, int]:
    """Pick (TB, TS) so the x block is ~target_bytes *after* native-tile padding."""
    sub = _sublane_min(elem_bytes)
    lane_phys = _round_up(lane, 128)
    row_bytes = lane_phys * elem_bytes
    max_rows = max(1, target_bytes // row_bytes)
    if rows <= max_rows:
        ts = rows                                   # whole (folded) sequence per block
        tb = min(batch, max(1, max_rows // rows))   # stack batches up to the budget
    else:
        # Tile the sequence rows in multiples of the native sublane count
        # (keeps every vreg/vst fully dense); batch handled by the grid.
        ts = min(rows, max(sub, (max_rows // sub) * sub))
        tb = 1
    return tb, ts


# --------------------------------------------------------------------------- #
# Wrapper
# --------------------------------------------------------------------------- #
def positional_encoding(x: jnp.ndarray, pe_table: jnp.ndarray, *,
                        target_block_bytes: int = 4 << 20,
                        donate_input: bool = False,
                        core_parallel: bool = False) -> jnp.ndarray:
    """x: [B, S, D]; pe_table: [max_len >= S, D]. Returns x + pe[:S] (eval dropout)."""
    B, S, D = x.shape
    if pe_table.shape[0] < S or pe_table.shape[1] != D:
        raise ValueError("pe_table must be [max_len >= S, d_model]")

    # pe preparation is cheap/fused under jit; pre-build the table in x.dtype
    # (make_pe_table(..., dtype=x.dtype)) so no per-call cast happens here.
    pe = pe_table if pe_table.shape[0] == S else pe_table[:S]
    if pe.dtype != x.dtype:
        pe = pe.astype(x.dtype)

    # Lane-dense fold: (B, S, D) -> (B, S/r, r*D); a free regrouping of the
    # contiguous (s, d) minor axes, exact w.r.t. the pe broadcast over batch.
    r = _fold_factor(S, D)
    P = S // r            # folded sequence rows
    L = r * D             # lane width (multiple of 128 when the fold succeeds)
    x3 = x.reshape(B, P, L)
    pe3 = pe.reshape(1, P, L)

    elem = jnp.dtype(x.dtype).itemsize
    TB, TS = _choose_tiles(B, P, L, elem, target_block_bytes)

    # seq-tiles outer, batch-tiles inner: pe block index is constant across the
    # inner axis, so each pe tile is DMA'd exactly once.
    grid = (pl.cdiv(P, TS), pl.cdiv(B, TB))

    # Padding-aware VMEM footprint (double-buffered x, out, pe) -> explicit limit.
    sub = _sublane_min(elem)
    rows_phys = _round_up(TS, sub)
    lane_phys = _round_up(L, 128)
    x_blk = TB * rows_phys * lane_phys * elem
    pe_blk = rows_phys * lane_phys * elem
    footprint = 2 * (2 * x_blk + pe_blk)
    vmem_limit = int(min(48 << 20, max(16 << 20, footprint + (4 << 20))))

    # CORE_PARALLEL shards the seq-tile axis across v7x's two TensorCores;
    # plain "parallel" everywhere is the safe default on all generations.
    seq_sem = pltpu.CORE_PARALLEL if core_parallel else "parallel"

    out3 = pl.pallas_call(
        _add_pe_kernel,
        out_shape=jax.ShapeDtypeStruct((B, P, L), x.dtype),
        grid_spec=pltpu.PrefetchScalarGridSpec(
            num_scalar_prefetch=0,
            grid=grid,
            in_specs=[
                pl.BlockSpec((TB, TS, L), lambda s, b: (b, s, 0)),   # activations
                pl.BlockSpec((1, TS, L), lambda s, b: (0, s, 0)),    # pe (ignores batch)
            ],
            out_specs=pl.BlockSpec((TB, TS, L), lambda s, b: (b, s, 0)),
        ),
        compiler_params=pltpu.CompilerParams(
            dimension_semantics=(seq_sem, "parallel"),
            vmem_limit_bytes=vmem_limit,
        ),
        input_output_aliases={0: 0} if donate_input else {},
    )(x3, pe3)

    return out3.reshape(B, S, D)


# --------------------------------------------------------------------------- #
# Self-test
# --------------------------------------------------------------------------- #
if __name__ == "__main__":
    # Shapes consistent with the module's forward: batch=2, seq=8, d_model=32.
    batch, seq_len, d_model, max_len = 2, 8, 32, 64

    key = jax.random.PRNGKey(0)
    x = jax.random.normal(key, (batch, seq_len, d_model), dtype=jnp.float32)
    pe_table = make_pe_table(d_model, max_len, dtype=x.dtype)   # built once, pre-cast

    ref = x + pe_table[None, :seq_len, :]          # eval-mode dropout = identity
    out = jax.block_until_ready(positional_encoding(x, pe_table))
    assert out.shape == (batch, seq_len, d_model)
    assert jnp.allclose(out, ref, atol=1e-6), "mismatch vs reference"

    # Multi-tile path: larger shape + tiny block budget forces a (2, 4) grid.
    b2, s2, d2 = 4, 64, 32
    x2 = jax.random.normal(jax.random.PRNGKey(1), (b2, s2, d2), jnp.float32)
    pe2 = make_pe_table(d2, 128, dtype=x2.dtype)
    ref2 = x2 + pe2[None, :s2, :]
    out2 = jax.block_until_ready(
        positional_encoding(x2, pe2, target_block_bytes=4096))
    assert jnp.allclose(out2, ref2, atol=1e-6), "tiled-path mismatch vs reference"

    # Odd d_model (exercises the fixed cos-half slicing and the r=1 fallback).
    b3, s3, d3 = 2, 8, 33
    x3 = jax.random.normal(jax.random.PRNGKey(2), (b3, s3, d3), jnp.float32)
    pe3 = make_pe_table(d3, 16, dtype=x3.dtype)
    ref3 = x3 + pe3[None, :s3, :]
    out3 = jax.block_until_ready(positional_encoding(x3, pe3))
    assert jnp.allclose(out3, ref3, atol=1e-6), "odd-d_model mismatch vs reference"

    print("KERNEL_OK")
</pallas_src>

<mosaic_0001>
module attributes {stable_mosaic.version = 11 : i64} {
  func.func @_add_pe_kernel(%arg0: i32, %arg1: i32, %arg2: memref<2x2x128xf32, #tpu.memory_space<vmem>>, %arg3: memref<1x2x128xf32, #tpu.memory_space<vmem>>, %arg4: memref<2x2x128xf32, #tpu.memory_space<vmem>>) attributes {dimension_semantics = [#tpu.dimension_semantics<parallel>, #tpu.dimension_semantics<parallel>], iteration_bounds = array<i64: 1, 1>, scalar_prefetch = 0 : i64, scratch_operands = 0 : i64, tpu.core_type = #tpu.core_type<tc>, window_params = [{transform_indices = @transform_0, window_bounds = array<i64: 2, 2, 128>}, {transform_indices = @transform_1, window_bounds = array<i64: 1, 2, 128>}, {transform_indices = @transform_2, window_bounds = array<i64: 2, 2, 128>}]} {
    %c0 = arith.constant 0 : index
    %c0_0 = arith.constant 0 : index
    %c0_1 = arith.constant 0 : index
    %0 = vector.load %arg2[%c0, %c0_0, %c0_1] : memref<2x2x128xf32, #tpu.memory_space<vmem>>, vector<2x2x128xf32>
    %c0_2 = arith.constant 0 : index
    %c0_3 = arith.constant 0 : index
    %c0_4 = arith.constant 0 : index
    %1 = vector.load %arg3[%c0_2, %c0_3, %c0_4] : memref<1x2x128xf32, #tpu.memory_space<vmem>>, vector<1x2x128xf32>
    %2 = vector.broadcast %1 : vector<1x2x128xf32> to vector<2x2x128xf32>
    %3 = arith.addf %0, %2 : vector<2x2x128xf32>
    %c0_5 = arith.constant 0 : index
    %c0_6 = arith.constant 0 : index
    %c0_7 = arith.constant 0 : index
    %4 = vector.load %arg4[%c0_5, %c0_6, %c0_7] : memref<2x2x128xf32, #tpu.memory_space<vmem>>, vector<2x2x128xf32>
    tpu.vector_store %arg4[%c0_5, %c0_6, %c0_7], %3 {strides = array<i32>} : memref<2x2x128xf32, #tpu.memory_space<vmem>>, vector<2x2x128xf32>,
    return
  }
  func.func @transform_0(%arg0: i32, %arg1: i32) -> (i32, i32, i32) {
    %c0_i32 = arith.constant 0 : i32
    %c0_i32_0 = arith.constant 0 : i32
    return %arg1, %arg0, %c0_i32 : i32, i32, i32
  }
  func.func @transform_1(%arg0: i32, %arg1: i32) -> (i32, i32, i32) {
    %c0_i32 = arith.constant 0 : i32
    %c0_i32_0 = arith.constant 0 : i32
    %c0_i32_1 = arith.constant 0 : i32
    return %c0_i32, %arg0, %c0_i32_0 : i32, i32, i32
  }
  func.func @transform_2(%arg0: i32, %arg1: i32) -> (i32, i32, i32) {
    %c0_i32 = arith.constant 0 : i32
    %c0_i32_0 = arith.constant 0 : i32
    return %arg1, %arg0, %c0_i32 : i32, i32, i32
  }
}

</mosaic_0001>

<llo_original>
// kernel: tpu_custom_call.1
$region0: #{tpu_custom_call.1}
  #allocation0 [shape = 'u32[]', space=smem, size = 0x4, offset = 0x4, fixed_abs, tag = 'smem constant byte address 0x4 - core index']
  #allocation1 [shape = 'u32[144,128]{1,0:T(1,128)}', space=vmem, size = 0x12000, scoped, tag = 'internal scratch']
  %s0 = inlined_call_operand.hbm [shape: f32[2,2,128], index: 0, kind: input, shape index: {}]
  %s1 = inlined_call_operand.vmem [shape: f32[1,2,128], index: 1, kind: input, shape index: {}]
  %s2 = inlined_call_operand.hbm [shape: f32[2,2,128], index: 2, kind: output, shape index: {}]
  %s3 = sld [smem:[#allocation0]]
  $region22: #{tpu_custom_call.1} parent=0
    _
  %s5 = ssub.s32 1, %s3
  %s6 = scalar_select 0, %s5, %s3
  $region1: #{tpu_custom_call.1} parent=0
    #allocation2 [shape = 'u8[2048]{0}', space=vmem, size = 0x800, scoped, tag = 'input window, operand 0, single buffered']
    #allocation3 [shape = 's32[1]{0}', space=sflag, size = 0x4, scoped, tag = 'scoped memory for tpu_custom_call.1']
    #allocation4 [shape = 's32[1]{0}', space=sflag, size = 0x4, scoped, tag = 'scoped memory for tpu_custom_call.1']
    #allocation5 [shape = 'u8[2048]{0}', space=vmem, size = 0x800, scoped, tag = 'output window, operand 0, single buffered']
    %7 = vsyncpa [#allocation3], 0
    %8 = vsyncpa [#allocation4], 0
    // Predicated region
    $region2: #{tpu_custom_call.1} parent=1 // pred_check
      _
    $region3: #{tpu_custom_call.1} parent=1 // pred_check_branch
      %10 = sbr.rel (0) target = $region5
    $region4: #{tpu_custom_call.1} parent=1 // pred_region
      %s12 = ssub.s32 64, 64
      %13 = vsyncadd [#allocation3], %s12
      %s14 = sshll.u32 [#allocation2], 4
      %s15 = int_to_ptr.vmem [resolvable:$true] %s14
      %20 = dma.hbm_to_vmem [thread:$0]  %s0, 64, %s15, [#allocation3], 32, 32, 2
    $region5: #{tpu_custom_call.1} parent=1 // pred_fallthru
      _
    // Predicated region
    $region6: #{tpu_custom_call.1} parent=1 // pred_check
      _
    $region7: #{tpu_custom_call.1} parent=1 // pred_check_branch
      %22 = sbr.rel (0) target = $region9
    $region8: #{tpu_custom_call.1} parent=1 // pred_region
      _
    $region9: #{tpu_custom_call.1} parent=1 // pred_fallthru
      _
    // Predicated region
    $region10: #{tpu_custom_call.1} parent=1 // pred_check
      _
    $region11: #{tpu_custom_call.1} parent=1 // pred_check_branch
      %24 = sbr.rel (0) target = $region13
    $region12: #{tpu_custom_call.1} parent=1 // pred_region
      %25 = dma.done [#allocation3], 64
    $region13: #{tpu_custom_call.1} parent=1 // pred_fallthru
      _
    %v26 = vld [vmem:[#allocation2] sm:$0x3]
    %v27 = vld [vmem:[#allocation2 + $0x2] sm:$0x3]
    %v28 = vld [vmem:[%s1] sm:$0x3]
    %v29 = vadd.f32 %v26, %v28
    %v30 = vadd.f32 %v27, %v28
    %31 = vst [vmem:[#allocation5] sm:$0x3] %v29
    %32 = vst [vmem:[#allocation5 + $0x2] sm:$0x3] %v30
    // Predicated region
    $region14: #{tpu_custom_call.1} parent=1 // pred_check
      _
    $region15: #{tpu_custom_call.1} parent=1 // pred_check_branch
      %34 = sbr.rel (0) target = $region17
    $region16: #{tpu_custom_call.1} parent=1 // pred_region
      %s36 = ssub.s32 64, 64
      %37 = vsyncadd [#allocation4], %s36
      %s38 = sshll.u32 [#allocation5], 4
      %s39 = int_to_ptr.vmem [resolvable:$true] %s38
      %44 = dma.vmem_to_hbm [thread:$0]  %s39, 64, %s2, [#allocation4], 32, 32, 2
    $region17: #{tpu_custom_call.1} parent=1 // pred_fallthru
      _
    // Predicated region
    $region18: #{tpu_custom_call.1} parent=1 // pred_check
      _
    $region19: #{tpu_custom_call.1} parent=1 // pred_check_branch
      %46 = sbr.rel (0) target = $region21
    $region20: #{tpu_custom_call.1} parent=1 // pred_region
      %47 = dma.done [#allocation4], 64
    $region21: #{tpu_custom_call.1} parent=1 // pred_fallthru
      _
    %48 = vsyncpa [#allocation3], 1
    %49 = vsyncpa [#allocation4], 1

</llo_original>
